<compile_context>
chip_gen: v6e
topology: v6e:2x2x1
jax: 0.10.0
libtpu: 0.0.40
codegen_flags: <defaults>
</compile_context>

<pallas_src>
import jax
import jax.numpy as jnp
from jax.experimental import pallas as pl
from jax.experimental.pallas import tpu as pltpu

NUM_CLASSES = 102
TILE_N_MAX = 2048     # (2048, 102) f32 block ~ 0.8 MiB; a few MiB total with
                      # double buffering -> comfortably inside scoped VMEM.


def _round_up(x, m):
    return (x + m - 1) // m * m


# --------------------------- kernel bodies ----------------------------------

def _one_hot_abs_diff(pred_ref, tgt_ref):
    """|pred - one_hot(target)| for one (TILE_N, C) tile (VPU only)."""
    pred = pred_ref[...]
    col = jax.lax.broadcasted_iota(jnp.int32, pred.shape, 1)      # (T, C)
    onehot = (col == tgt_ref[...]).astype(pred.dtype)             # (T, 1) bcast
    return jnp.abs(pred - onehot)


def _make_sum_kernel(has_weight, n_rows, tile_n, ragged):
    """Per-tile partial sum kernel ('mean'/'sum' reductions)."""

    def kernel(*refs):
        if has_weight:
            pred_ref, tgt_ref, w_ref, psum_ref = refs
        else:
            pred_ref, tgt_ref, psum_ref = refs

        loss = _one_hot_abs_diff(pred_ref, tgt_ref).astype(jnp.float32)
        if has_weight:
            loss = loss * w_ref[...].astype(jnp.float32)   # bcast in-vreg
        if ragged:
            # Last tile extends past N: drop out-of-range rows with a select
            # so undefined padding data (even NaN) cannot reach the sum.
            row = (pl.program_id(0) * tile_n
                   + jax.lax.broadcasted_iota(jnp.int32, (tile_n, 1), 0))
            loss = jnp.where(row < n_rows, loss, 0.0)
        psum_ref[0, 0] = jnp.sum(loss)

    return kernel


def _make_elem_kernel(has_weight):
    """Elementwise kernel ('none' reduction); OOB rows of the last tile are
    discarded by Pallas on writeback, so no masking is needed."""

    def kernel(*refs):
        if has_weight:
            pred_ref, tgt_ref, w_ref, out_ref = refs
            loss = _one_hot_abs_diff(pred_ref, tgt_ref) * w_ref[...]
        else:
            pred_ref, tgt_ref, out_ref = refs
            loss = _one_hot_abs_diff(pred_ref, tgt_ref)
        out_ref[...] = loss.astype(out_ref.dtype)

    return kernel


# --------------------------- wrapper plumbing --------------------------------

_COMPILER_PARAMS = pltpu.CompilerParams(
    dimension_semantics=("parallel",),       # independent tiles: megacore-friendly
    vmem_limit_bytes=32 * 1024 * 1024,       # explicit, v7x-safe (64 MiB physical)
)


def _weight_arg(weight, n, c, tile_n, dtype):
    """Pass weights unbroadcast where possible; broadcast happens in-vreg."""
    weight = jnp.asarray(weight).astype(dtype)
    if weight.shape in ((c,), (1, c)):
        # per-class weight: single row, broadcast on the VPU inside the kernel
        return weight.reshape(1, c), pl.BlockSpec((1, c), lambda i: (0, 0))
    if weight.shape == (n, 1):
        # per-row weight: single column, broadcast inside the kernel
        return weight, pl.BlockSpec((tile_n, 1), lambda i: (i, 0))
    w_full = jnp.broadcast_to(weight, (n, c)).astype(dtype)
    return w_full, pl.BlockSpec((tile_n, c), lambda i: (i, 0))


# ----------------------------- public API ------------------------------------

def l1_loss(pred, target, weight=None, reduction='mean', avg_factor=None,
            tile_n=None):
    """Pallas-backed equivalent of mmcls' @weighted_loss l1_loss."""
    assert pred.ndim == 2 and pred.shape[1] == NUM_CLASSES
    assert pred.shape[0] == target.shape[0] and pred.size > 0
    n, c = pred.shape

    if tile_n is None:
        tile_n = min(TILE_N_MAX, _round_up(n, 8))
    tile_n = max(8, _round_up(tile_n, 8))
    num_tiles = (n + tile_n - 1) // tile_n
    ragged = (n % tile_n) != 0

    tgt = target.astype(jnp.int32).reshape(n, 1)

    in_specs = [pl.BlockSpec((tile_n, c), lambda i: (i, 0)),   # pred
                pl.BlockSpec((tile_n, 1), lambda i: (i, 0))]   # target
    args = [pred, tgt]

    has_weight = weight is not None
    if has_weight:
        w_arr, w_spec = _weight_arg(weight, n, c, tile_n, pred.dtype)
        in_specs.append(w_spec)
        args.append(w_arr)

    if reduction == 'none':
        out = pl.pallas_call(
            _make_elem_kernel(has_weight),
            out_shape=jax.ShapeDtypeStruct((n, c), pred.dtype),
            grid=(num_tiles,),
            in_specs=in_specs,
            out_specs=pl.BlockSpec((tile_n, c), lambda i: (i, 0)),
            compiler_params=_COMPILER_PARAMS,
        )(*args)
        return out

    if reduction not in ('mean', 'sum'):
        raise ValueError(f'unsupported reduction: {reduction}')

    partials = pl.pallas_call(
        _make_sum_kernel(has_weight, n, tile_n, ragged),
        out_shape=jax.ShapeDtypeStruct((num_tiles, 1), jnp.float32),
        grid=(num_tiles,),
        in_specs=in_specs,
        out_specs=pl.BlockSpec((1, 1), lambda i: (i, 0),
                               memory_space=pltpu.SMEM),
        compiler_params=_COMPILER_PARAMS,
    )(*args)
    total = jnp.sum(partials)

    if reduction == 'sum':
        if avg_factor is not None:
            raise ValueError('avg_factor can not be used with reduction="sum"')
        return total.astype(pred.dtype)

    # 'mean'
    denom = jnp.float32(pred.size) if avg_factor is None else jnp.float32(avg_factor)
    return (total / denom).astype(pred.dtype)


class L1Loss:
    """JAX/Pallas port of mmcls L1Loss (forward only)."""

    def __init__(self, reduction='mean', loss_weight=1.0):
        self.reduction = reduction
        self.loss_weight = loss_weight

    def __call__(self, pred, target, weight=None, avg_factor=None,
                 reduction_override=None):
        assert reduction_override in (None, 'none', 'mean', 'sum')
        reduction = reduction_override if reduction_override else self.reduction
        loss = l1_loss(pred, target, weight=weight, reduction=reduction,
                       avg_factor=avg_factor)
        if self.loss_weight == 1.0:      # avoid a pointless extra elementwise pass
            return loss
        return self.loss_weight * loss


# ------------------------------- self test ------------------------------------

if __name__ == "__main__":
    key = jax.random.PRNGKey(0)
    kp, kt, kw = jax.random.split(key, 3)

    N = 8
    pred = jax.random.normal(kp, (N, NUM_CLASSES), dtype=jnp.float32)
    target = jax.random.randint(kt, (N,), 0, NUM_CLASSES, dtype=jnp.int32)

    onehot_ref = jax.nn.one_hot(target, NUM_CLASSES, dtype=jnp.float32)
    abs_ref = jnp.abs(pred - onehot_ref)

    loss_mod = L1Loss(reduction='mean', loss_weight=1.0)

    # mean
    out = jax.block_until_ready(loss_mod(pred, target))
    assert jnp.allclose(out, jnp.mean(abs_ref), rtol=1e-5, atol=1e-5), (out,)

    # none
    out_none = jax.block_until_ready(loss_mod(pred, target,
                                              reduction_override='none'))
    assert out_none.shape == (N, NUM_CLASSES)
    assert jnp.allclose(out_none, abs_ref, rtol=1e-5, atol=1e-5)

    # sum
    out_sum = jax.block_until_ready(loss_mod(pred, target,
                                             reduction_override='sum'))
    assert jnp.allclose(out_sum, jnp.sum(abs_ref), rtol=1e-5, atol=1e-4)

    # elementwise weight + avg_factor (mean path)
    w_full = jax.random.uniform(kw, (N, NUM_CLASSES), dtype=jnp.float32)
    out_w = jax.block_until_ready(loss_mod(pred, target, weight=w_full,
                                           avg_factor=3.0))
    assert jnp.allclose(out_w, jnp.sum(abs_ref * w_full) / 3.0,
                        rtol=1e-5, atol=1e-4)

    # per-row weight passed unbroadcast (N, 1), 'sum'
    w_row = jax.random.uniform(kw, (N, 1), dtype=jnp.float32)
    out_wr = jax.block_until_ready(loss_mod(pred, target, weight=w_row,
                                            reduction_override='sum'))
    assert jnp.allclose(out_wr, jnp.sum(abs_ref * w_row), rtol=1e-5, atol=1e-4)

    # per-class weight (C,), 'mean'
    w_cls = jax.random.uniform(kw, (NUM_CLASSES,), dtype=jnp.float32)
    out_wc = jax.block_until_ready(loss_mod(pred, target, weight=w_cls))
    assert jnp.allclose(out_wc, jnp.mean(abs_ref * w_cls[None, :]),
                        rtol=1e-5, atol=1e-5)

    # multi-tile grid with a ragged last tile (N not a multiple of tile_n)
    N2 = 40
    pred2 = jax.random.normal(kp, (N2, NUM_CLASSES), dtype=jnp.float32)
    target2 = jax.random.randint(kt, (N2,), 0, NUM_CLASSES, dtype=jnp.int32)
    abs_ref2 = jnp.abs(pred2 - jax.nn.one_hot(target2, NUM_CLASSES,
                                              dtype=jnp.float32))
    out2 = jax.block_until_ready(
        l1_loss(pred2, target2, reduction='mean', tile_n=16))  # grid = 3, ragged
    assert jnp.allclose(out2, jnp.mean(abs_ref2), rtol=1e-5, atol=1e-5)

    out2_none = jax.block_until_ready(
        l1_loss(pred2, target2, reduction='none', tile_n=16))
    assert out2_none.shape == (N2, NUM_CLASSES)
    assert jnp.allclose(out2_none, abs_ref2, rtol=1e-5, atol=1e-5)

    print("KERNEL_OK")
</pallas_src>

<mosaic_0001>
module attributes {stable_mosaic.version = 11 : i64} {
  func.func @kernel(%arg0: i32, %arg1: memref<8x102xf32, #tpu.memory_space<vmem>>, %arg2: memref<8x1xi32, #tpu.memory_space<vmem>>, %arg3: memref<1x1xf32, #tpu.memory_space<smem>>) attributes {dimension_semantics = [#tpu.dimension_semantics<parallel>], iteration_bounds = array<i64: 1>, scalar_prefetch = 0 : i64, scratch_operands = 0 : i64, tpu.core_type = #tpu.core_type<tc>, window_params = [{transform_indices = @transform_0, window_bounds = array<i64: 8, 102>}, {transform_indices = @transform_1, window_bounds = array<i64: 8, 1>}, {transform_indices = @transform_2, window_bounds = array<i64: 1, 1>}]} {
    %c0 = arith.constant 0 : index
    %c0_0 = arith.constant 0 : index
    %0 = vector.load %arg1[%c0, %c0_0] : memref<8x102xf32, #tpu.memory_space<vmem>>, vector<8x102xf32>
    %1 = tpu.iota {dimensions = array<i32: 1>} : vector<8x102xi32>
    %c0_1 = arith.constant 0 : index
    %c0_2 = arith.constant 0 : index
    %2 = vector.load %arg2[%c0_1, %c0_2] : memref<8x1xi32, #tpu.memory_space<vmem>>, vector<8x1xi32>
    %3 = vector.broadcast %2 : vector<8x1xi32> to vector<8x102xi32>
    %4 = arith.cmpi eq, %1, %3 : vector<8x102xi32>
    %5 = arith.extui %4 : vector<8x102xi1> to vector<8x102xi32>
    %6 = arith.sitofp %5 : vector<8x102xi32> to vector<8x102xf32>
    %7 = arith.subf %0, %6 : vector<8x102xf32>
    %8 = math.absf %7 : vector<8x102xf32>
    %9 = vector.shape_cast %8 : vector<8x102xf32> to vector<1x8x102xf32>
    %cst = arith.constant dense<0.000000e+00> : vector<1xf32>
    %10 = vector.multi_reduction <add>, %9, %cst [1, 2] : vector<1x8x102xf32> to vector<1xf32>
    %11 = vector.shape_cast %10 : vector<1xf32> to vector<1x1x1xf32>
    %12 = vector.extract %11[0, 0, 0] : f32 from vector<1x1x1xf32>
    %c0_3 = arith.constant 0 : index
    %c0_4 = arith.constant 0 : index
    %13 = memref.load %arg3[%c0_3, %c0_4] : memref<1x1xf32, #tpu.memory_space<smem>>
    memref.store %12, %arg3[%c0_3, %c0_4] : memref<1x1xf32, #tpu.memory_space<smem>>
    return
  }
  func.func @transform_0(%arg0: i32) -> (i32, i32) {
    %c0_i32 = arith.constant 0 : i32
    %c0_i32_0 = arith.constant 0 : i32
    return %arg0, %c0_i32 : i32, i32
  }
  func.func @transform_1(%arg0: i32) -> (i32, i32) {
    %c0_i32 = arith.constant 0 : i32
    %c0_i32_0 = arith.constant 0 : i32
    return %arg0, %c0_i32 : i32, i32
  }
  func.func @transform_2(%arg0: i32) -> (i32, i32) {
    %c0_i32 = arith.constant 0 : i32
    %c0_i32_0 = arith.constant 0 : i32
    return %arg0, %c0_i32 : i32, i32
  }
}

</mosaic_0001>

<llo_original>
// kernel: tpu_custom_call.1
$region0: #{tpu_custom_call.1}
  #allocation0 [shape = 'u32[]', space=smem, size = 0x4, offset = 0x4, fixed_abs, tag = 'smem constant byte address 0x4 - core index']
  #allocation1 [shape = 'u32[144,128]{1,0:T(1,128)}', space=vmem, size = 0x12000, scoped, tag = 'internal scratch']
  %s0 = inlined_call_operand.vmem [shape: f32[8,102], index: 0, kind: input, shape index: {}]
  %s1 = inlined_call_operand.vmem [shape: s32[8,1], index: 1, kind: input, shape index: {}]
  %s2 = inlined_call_operand.hbm [shape: f32[1,1], index: 2, kind: output, shape index: {}]
  %s3 = sld [smem:[#allocation0]]
  $region18: #{tpu_custom_call.1} parent=0
    _
  %s5 = ssub.s32 1, %s3
  %s6 = scalar_select 0, %s5, %s3
  $region1: #{tpu_custom_call.1} parent=0
    #allocation2 [shape = 'u8[512]{0}', space=smem, size = 0x200, scoped, tag = 'output window, operand 0, single buffered']
    #allocation3 [shape = 's32[1]{0}', space=sflag, size = 0x4, scoped, tag = 'scoped memory for tpu_custom_call.1']
    %7 = vsyncpa [#allocation3], 0
    // Predicated region
    $region2: #{tpu_custom_call.1} parent=1 // pred_check
      _
    $region3: #{tpu_custom_call.1} parent=1 // pred_check_branch
      %9 = sbr.rel (0) target = $region5
    $region4: #{tpu_custom_call.1} parent=1 // pred_region
      _
    $region5: #{tpu_custom_call.1} parent=1 // pred_fallthru
      _
    // Predicated region
    $region6: #{tpu_custom_call.1} parent=1 // pred_check
      _
    $region7: #{tpu_custom_call.1} parent=1 // pred_check_branch
      %11 = sbr.rel (0) target = $region9
    $region8: #{tpu_custom_call.1} parent=1 // pred_region
      _
    $region9: #{tpu_custom_call.1} parent=1 // pred_fallthru
      _
    %v12 = vld [vmem:[%s0] sm:$0xff]
    %v13 = vlaneseq
    %v14 = vand.u32 %v13, 127
    %v15 = vld [vmem:[%s1] sm:$0xff]
    %16 = vset.pattern.permute.xlu0 0
    %17 = vperm.xlu0 %16, %v15
    %v18 = vpop.permute.xlu0 %17
    %vm19 = vcmp.eq.s32.totalorder %v14, %v18
    %v20 = vsel %vm19, 1, 0
    %v21 = vcvt.s32.f32 %v20
    %v22 = vsub.f32 %v12, %v21
    %v23 = vand.u32 2147483647, %v22
    %vm24 = vcmask 834560
    %v25 = vsel %vm24, %v23, 0.0
    %26 = vadd.xlane.f32.xlu0 %v25
    %v27 = vpop.xlane.xlu0 %26
    %v28 = vrot.slane %v27, 4
    %v29 = vadd.f32 %v27, %v28
    %v30 = vrot.slane %v29, 2
    %v31 = vadd.f32 %v29, %v30
    %v32 = vrot.slane %v31, 1
    %v33 = vadd.f32 %v31, %v32
    %s34 = vtos %v33
    %s35 = scalar_lea.smem [#allocation2], 0
    %36 = sst [smem:[%s35]] %s34
    // Predicated region
    $region10: #{tpu_custom_call.1} parent=1 // pred_check
      _
    $region11: #{tpu_custom_call.1} parent=1 // pred_check_branch
      %38 = sbr.rel (0) target = $region13
    $region12: #{tpu_custom_call.1} parent=1 // pred_region
      %s40 = ssub.s32 16, 16
      %41 = vsyncadd [#allocation3], %s40
      %44 = dma.smem_to_hbm [#allocation2], 16, %s2, [#allocation3]
    $region13: #{tpu_custom_call.1} parent=1 // pred_fallthru
      _
    // Predicated region
    $region14: #{tpu_custom_call.1} parent=1 // pred_check
      _
    $region15: #{tpu_custom_call.1} parent=1 // pred_check_branch
      %46 = sbr.rel (0) target = $region17
    $region16: #{tpu_custom_call.1} parent=1 // pred_region
      %47 = dma.done [#allocation3], 16
    $region17: #{tpu_custom_call.1} parent=1 // pred_fallthru
      _
    %48 = sfence
    %49 = vsyncpa [#allocation3], 1

</llo_original>
